<compile_context>
chip_gen: v7x
topology: tpu7x:2x2x1
jax: 0.10.0
libtpu: 0.0.40
codegen_flags: <defaults>
</compile_context>

<pallas_src>
import functools
from typing import NamedTuple

import jax
import jax.numpy as jnp
from jax.experimental import pallas as pl
from jax.experimental.pallas import tpu as pltpu


def _round_up(x, m):
    return ((x + m - 1) // m) * m


_INV_SQRT2 = 0.7071067811865476  # 1/sqrt(2)


# --------------------------------------------------------------------------
# Kernels
# --------------------------------------------------------------------------
def _mlp_kernel_fused_out(x_ref, w1_ref, b1_ref, w2_ref, b2_ref, o_ref):
    """f32-output variant: accumulate directly into the resident output tile.

    x_ref:(TM,H_pad)  w1_ref:(H_pad,TF)  b1_ref:(1,TF) f32
    w2_ref:(TF,H_pad) b2_ref:(1,H_pad) f32  o_ref:(TM,H_pad) f32
    grid axis 0: token tiles ("parallel"), axis 1: F chunks ("arbitrary").
    """
    k = pl.program_id(1)

    @pl.when(k == 0)
    def _():
        # seed the accumulator (the output tile itself) with the fc2 bias
        o_ref[...] = jnp.broadcast_to(b2_ref[...], o_ref.shape)

    # fc1 chunk on the MXU, f32 accumulation
    h = jnp.dot(x_ref[...], w1_ref[...], preferred_element_type=jnp.float32)
    h = h + b1_ref[...]
    # exact (erf-based) GELU in f32 -- matches torch.nn.functional.gelu default
    h = 0.5 * h * (1.0 + jax.lax.erf(h * _INV_SQRT2))
    # dropout == identity in eval mode
    # fc2 chunk: reduce over F into the resident f32 output tile
    o_ref[...] += jnp.dot(h.astype(w2_ref.dtype), w2_ref[...],
                          preferred_element_type=jnp.float32)


def _mlp_kernel_scratch_out(x_ref, w1_ref, b1_ref, w2_ref, b2_ref, o_ref, acc_ref):
    """Generic-output variant (non-f32 outputs): f32 VMEM scratch accumulator."""
    k = pl.program_id(1)

    @pl.when(k == 0)
    def _():
        acc_ref[...] = jnp.broadcast_to(b2_ref[...], acc_ref.shape)

    h = jnp.dot(x_ref[...], w1_ref[...], preferred_element_type=jnp.float32)
    h = h + b1_ref[...]
    h = 0.5 * h * (1.0 + jax.lax.erf(h * _INV_SQRT2))
    acc_ref[...] += jnp.dot(h.astype(w2_ref.dtype), w2_ref[...],
                            preferred_element_type=jnp.float32)

    @pl.when(k == pl.num_programs(1) - 1)
    def _():
        o_ref[...] = acc_ref[...].astype(o_ref.dtype)


# --------------------------------------------------------------------------
# Hardware-aware configuration
# --------------------------------------------------------------------------
def _tpu_target():
    """Return (generation, vmem_limit_bytes) derived from the attached TPU."""
    try:
        kind = jax.devices()[0].device_kind.lower()
    except Exception:
        kind = ""
    if "v5 lite" in kind or "v5e" in kind or "v5litepod" in kind:
        return "v5e", 100 * 1024 * 1024
    if "v6" in kind:
        return "v6e", 100 * 1024 * 1024
    if "v7" in kind:
        return "v7x", 56 * 1024 * 1024        # 64 MiB physical; leave headroom
    if "v5p" in kind or "v5" in kind or "v4" in kind or "v3" in kind:
        return "other128", 100 * 1024 * 1024
    return "unknown", 56 * 1024 * 1024         # conservative (v7x-sized VMEM)


def _derive_tm(M, H_pad, tf, compute_bytes, out_bytes, use_scratch, gen, vmem_limit):
    """Token-tile size: as large as the VMEM budget & per-gen target allow."""
    # TM-independent VMEM: double-buffered w1/w2 chunks + biases.
    fixed = 4 * H_pad * tf * compute_bytes + 8 * (tf + H_pad)
    # Per token row: double-buffered x + out tiles, optional f32 scratch,
    # plus the live (TM, TF) f32 GELU intermediate and its bf16 cast copy.
    per_row = H_pad * (2 * compute_bytes + 2 * out_bytes + (4 if use_scratch else 0))
    per_row += tf * (4 + compute_bytes)
    budget = vmem_limit - fixed - (4 << 20)    # slack for compiler internals
    tm_cap = max(8, (budget // per_row) // 8 * 8) if budget > 0 else 8
    # Per-generation target so weight re-streaming isn't the binding HBM term.
    target = {"v5e": 512, "v6e": 1024, "v7x": 512}.get(gen, 512)
    tm = min(tm_cap, target, _round_up(M, 8))
    if gen == "v7x" and M > 8:
        # guarantee >= 2 token tiles so both TensorCores get work
        tm = min(tm, _round_up((M + 1) // 2, 8))
    return max(int(tm), 8)


# --------------------------------------------------------------------------
# Parameter preparation (runs ONCE, outside the hot path)
# --------------------------------------------------------------------------
class MlpParams(NamedTuple):
    w1: jax.Array          # (H_pad, F_pad) compute_dtype
    b1: jax.Array          # (1, F_pad)     f32
    w2: jax.Array          # (F_pad, H_pad) compute_dtype
    b2: jax.Array          # (1, H_pad)     f32
    hidden_dim: int
    tf: int
    generation: str
    vmem_limit: int


def prepare_mlp_params(w1, b1, w2, b2, *, compute_dtype=None):
    """Pad/cast the fc1/fc2 weights once. w1:(H,F) b1:(F,) w2:(F,H) b2:(H,)."""
    H, F_dim = w1.shape
    gen, vmem_limit = _tpu_target()
    if compute_dtype is None:
        # bf16 is the only fast MXU input format on v7x and the native rate on
        # v6e (f32 runs as multi-pass emulation); keep f32 elsewhere by default.
        compute_dtype = jnp.bfloat16 if gen in ("v6e", "v7x") else jnp.float32
    compute_dtype = jnp.dtype(compute_dtype)

    H_pad = _round_up(H, 128)                  # lane-dense, unmasked stores
    F_pad = _round_up(F_dim, 128)
    # dtype-aware reduction chunk: keeps double-buffered weight chunks small
    # enough for v7x's 64 MiB VMEM on the f32 path.
    tf = min(F_pad, 256 if compute_dtype.itemsize >= 4 else 512)
    F_pad = _round_up(F_pad, tf)

    # zero padding is exactly neutral through bias + GELU + matmul
    w1p = jnp.pad(w1.astype(compute_dtype), ((0, H_pad - H), (0, F_pad - F_dim)))
    w2p = jnp.pad(w2.astype(compute_dtype), ((0, F_pad - F_dim), (0, H_pad - H)))
    b1p = jnp.pad(b1.astype(jnp.float32), (0, F_pad - F_dim)).reshape(1, F_pad)
    b2p = jnp.pad(b2.astype(jnp.float32), (0, H_pad - H)).reshape(1, H_pad)
    return MlpParams(w1p, b1p, w2p, b2p, H, tf, gen, int(vmem_limit))


# --------------------------------------------------------------------------
# Forward
# --------------------------------------------------------------------------
@functools.partial(jax.jit,
                   static_argnames=("hidden_dim", "tf", "generation", "vmem_limit"))
def _mlp_forward_impl(x, w1p, b1p, w2p, b2p, *, hidden_dim, tf, generation,
                      vmem_limit):
    B, S, H = x.shape
    assert H == hidden_dim, "input feature dim does not match fc1 input dim"
    H_pad, F_pad = w1p.shape
    compute_dtype = w1p.dtype
    out_dtype = x.dtype
    M = B * S

    use_scratch = out_dtype != jnp.float32
    TM = _derive_tm(M, H_pad, tf, jnp.dtype(compute_dtype).itemsize,
                    jnp.dtype(out_dtype).itemsize, use_scratch, generation,
                    vmem_limit)
    M_pad = _round_up(M, TM)

    x2d = x.reshape(M, H).astype(compute_dtype)
    x2d = jnp.pad(x2d, ((0, M_pad - M), (0, H_pad - H)))

    grid = (M_pad // TM, F_pad // tf)

    in_specs = [
        pl.BlockSpec((TM, H_pad), lambda i, k: (i, 0)),   # x tile (resident over k)
        pl.BlockSpec((H_pad, tf), lambda i, k: (0, k)),   # w1 chunk
        pl.BlockSpec((1, tf),     lambda i, k: (0, k)),   # b1 chunk
        pl.BlockSpec((tf, H_pad), lambda i, k: (k, 0)),   # w2 chunk
        pl.BlockSpec((1, H_pad),  lambda i, k: (0, 0)),   # b2 (resident)
    ]
    out_spec = pl.BlockSpec((TM, H_pad), lambda i, k: (i, 0))

    if use_scratch:
        kernel = _mlp_kernel_scratch_out
        scratch_shapes = [pltpu.VMEM((TM, H_pad), jnp.float32)]
    else:
        kernel = _mlp_kernel_fused_out      # accumulate straight into o_ref (f32)
        scratch_shapes = []

    out2d = pl.pallas_call(
        kernel,
        out_shape=jax.ShapeDtypeStruct((M_pad, H_pad), out_dtype),
        grid_spec=pltpu.PrefetchScalarGridSpec(
            num_scalar_prefetch=0,
            grid=grid,
            in_specs=in_specs,
            out_specs=out_spec,
            scratch_shapes=scratch_shapes,
        ),
        compiler_params=pltpu.CompilerParams(
            dimension_semantics=("parallel", "arbitrary"),
            vmem_limit_bytes=vmem_limit,
        ),
    )(x2d, w1p, b1p, w2p, b2p)

    return out2d[:M, :H].reshape(B, S, H)


def mlp_forward(x, params: MlpParams):
    """x: (B, S, hidden_dim) -> (B, S, hidden_dim)."""
    return _mlp_forward_impl(
        x, params.w1, params.b1, params.w2, params.b2,
        hidden_dim=params.hidden_dim, tf=params.tf,
        generation=params.generation, vmem_limit=params.vmem_limit)


# --------------------------------------------------------------------------
# Demo / correctness check
# --------------------------------------------------------------------------
def xavier_uniform(key, shape, dtype=jnp.float32):
    # matches nn.init.xavier_uniform_ for a Linear weight of shape (fan_in, fan_out)
    fan_in, fan_out = shape
    limit = jnp.sqrt(6.0 / (fan_in + fan_out))
    return jax.random.uniform(key, shape, dtype, minval=-limit, maxval=limit)


if __name__ == "__main__":
    # config: hidden_dim=32, fuse_mlp_dim=64, fuse_dropout_rate (unused: eval mode)
    hidden_dim = 32
    fuse_mlp_dim = 64
    batch, seq = 2, 8

    key = jax.random.PRNGKey(0)
    k_x, k_w1, k_b1, k_w2, k_b2 = jax.random.split(key, 5)

    x = jax.random.normal(k_x, (batch, seq, hidden_dim), jnp.float32)

    # weights stored as (in, out) so the kernel computes x @ W (== x @ torch_W.T)
    w1 = xavier_uniform(k_w1, (hidden_dim, fuse_mlp_dim))
    b1 = 1e-6 * jax.random.normal(k_b1, (fuse_mlp_dim,), jnp.float32)
    w2 = xavier_uniform(k_w2, (fuse_mlp_dim, hidden_dim))
    b2 = 1e-6 * jax.random.normal(k_b2, (hidden_dim,), jnp.float32)

    # plain-JAX reference (erf-based GELU == torch default)
    h_ref = x.reshape(-1, hidden_dim) @ w1 + b1
    h_ref = 0.5 * h_ref * (1.0 + jax.lax.erf(h_ref / jnp.sqrt(2.0)))
    ref = (h_ref @ w2 + b2).reshape(batch, seq, hidden_dim)

    # f32 path (exact semantics of the PyTorch module)
    params_f32 = prepare_mlp_params(w1, b1, w2, b2, compute_dtype=jnp.float32)
    out = mlp_forward(x, params_f32)
    jax.block_until_ready(out)
    assert out.shape == x.shape and out.dtype == x.dtype
    assert jnp.allclose(out, ref, atol=1e-5, rtol=1e-5)

    # bf16-MXU path (f32 accumulation / f32 GELU); looser tol for bf16 rounding
    params_bf16 = prepare_mlp_params(w1, b1, w2, b2, compute_dtype=jnp.bfloat16)
    out_bf16 = mlp_forward(x, params_bf16)
    jax.block_until_ready(out_bf16)
    assert jnp.allclose(out_bf16, ref, atol=5e-2, rtol=5e-2)

    # hardware-default path (auto compute dtype per generation)
    params_auto = prepare_mlp_params(w1, b1, w2, b2)
    out_auto = mlp_forward(x, params_auto)
    jax.block_until_ready(out_auto)
    assert jnp.allclose(out_auto, ref, atol=5e-2, rtol=5e-2)

    print("KERNEL_OK")
</pallas_src>

<mosaic_0001>
module attributes {stable_mosaic.version = 11 : i64} {
  func.func @_mlp_kernel_fused_out(%arg0: i32, %arg1: i32, %arg2: memref<16x128xf32, #tpu.memory_space<vmem>>, %arg3: memref<128x128xf32, #tpu.memory_space<vmem>>, %arg4: memref<1x128xf32, #tpu.memory_space<vmem>>, %arg5: memref<128x128xf32, #tpu.memory_space<vmem>>, %arg6: memref<1x128xf32, #tpu.memory_space<vmem>>, %arg7: memref<16x128xf32, #tpu.memory_space<vmem>>) attributes {dimension_semantics = [#tpu.dimension_semantics<parallel>, #tpu.dimension_semantics<arbitrary>], iteration_bounds = array<i64: 1, 1>, scalar_prefetch = 0 : i64, scratch_operands = 0 : i64, tpu.core_type = #tpu.core_type<tc>, window_params = [{transform_indices = @transform_0, window_bounds = array<i64: 16, 128>}, {transform_indices = @transform_1, window_bounds = array<i64: 128, 128>}, {transform_indices = @transform_2, window_bounds = array<i64: 1, 128>}, {transform_indices = @transform_3, window_bounds = array<i64: 128, 128>}, {pipeline_mode = #tpu.pipeline_mode<synchronous>, transform_indices = @transform_4, window_bounds = array<i64: 1, 128>}, {transform_indices = @transform_5, window_bounds = array<i64: 16, 128>}]} {
    %c0_i32 = arith.constant 0 : i32
    %0 = arith.cmpi eq, %arg1, %c0_i32 : i32
    %1 = arith.extui %0 : i1 to i32
    %c0_i32_0 = arith.constant 0 : i32
    %2 = arith.cmpi ne, %1, %c0_i32_0 : i32
    scf.if %2 {
      %c0_16 = arith.constant 0 : index
      %c0_17 = arith.constant 0 : index
      %22 = vector.load %arg6[%c0_16, %c0_17] : memref<1x128xf32, #tpu.memory_space<vmem>>, vector<1x128xf32>
      %23 = vector.shape_cast %22 : vector<1x128xf32> to vector<1x128xf32>
      %24 = vector.broadcast %23 : vector<1x128xf32> to vector<16x128xf32>
      %c0_18 = arith.constant 0 : index
      %c0_19 = arith.constant 0 : index
      %25 = vector.load %arg7[%c0_18, %c0_19] : memref<16x128xf32, #tpu.memory_space<vmem>>, vector<16x128xf32>
      tpu.vector_store %arg7[%c0_18, %c0_19], %24 {strides = array<i32>} : memref<16x128xf32, #tpu.memory_space<vmem>>, vector<16x128xf32>,
    } else {
    }
    %c0 = arith.constant 0 : index
    %c0_1 = arith.constant 0 : index
    %3 = vector.load %arg2[%c0, %c0_1] : memref<16x128xf32, #tpu.memory_space<vmem>>, vector<16x128xf32>
    %c0_2 = arith.constant 0 : index
    %c0_3 = arith.constant 0 : index
    %4 = vector.load %arg3[%c0_2, %c0_3] : memref<128x128xf32, #tpu.memory_space<vmem>>, vector<128x128xf32>
    %cst = arith.constant dense<0.000000e+00> : vector<16x128xf32>
    %5 = tpu.matmul %3, %4, %cst {dimension_numbers = #tpu.dot_dimension_numbers<[1], [0], [0], [1], [0, 0, 1, 1], [], []>} : vector<16x128xf32>, vector<128x128xf32>, vector<16x128xf32> -> vector<16x128xf32>
    %c0_4 = arith.constant 0 : index
    %c0_5 = arith.constant 0 : index
    %6 = vector.load %arg4[%c0_4, %c0_5] : memref<1x128xf32, #tpu.memory_space<vmem>>, vector<1x128xf32>
    %7 = vector.broadcast %6 : vector<1x128xf32> to vector<16x128xf32>
    %8 = arith.addf %5, %7 : vector<16x128xf32>
    %cst_6 = arith.constant 5.000000e-01 : f32
    %9 = vector.broadcast %cst_6 : f32 to vector<16x128xf32>
    %10 = arith.mulf %9, %8 : vector<16x128xf32>
    %cst_7 = arith.constant 0.707106769 : f32
    %11 = vector.broadcast %cst_7 : f32 to vector<16x128xf32>
    %12 = arith.mulf %8, %11 : vector<16x128xf32>
    %13 = math.erf %12 : vector<16x128xf32>
    %cst_8 = arith.constant 1.000000e+00 : f32
    %14 = vector.broadcast %cst_8 : f32 to vector<16x128xf32>
    %15 = arith.addf %14, %13 : vector<16x128xf32>
    %16 = arith.mulf %10, %15 : vector<16x128xf32>
    %c0_9 = arith.constant 0 : index
    %c0_10 = arith.constant 0 : index
    %17 = vector.load %arg7[%c0_9, %c0_10] : memref<16x128xf32, #tpu.memory_space<vmem>>, vector<16x128xf32>
    %c0_11 = arith.constant 0 : index
    %c0_12 = arith.constant 0 : index
    %18 = vector.load %arg5[%c0_11, %c0_12] : memref<128x128xf32, #tpu.memory_space<vmem>>, vector<128x128xf32>
    %cst_13 = arith.constant dense<0.000000e+00> : vector<16x128xf32>
    %19 = tpu.matmul %16, %18, %cst_13 {dimension_numbers = #tpu.dot_dimension_numbers<[1], [0], [0], [1], [0, 0, 1, 1], [], []>} : vector<16x128xf32>, vector<128x128xf32>, vector<16x128xf32> -> vector<16x128xf32>
    %20 = arith.addf %17, %19 : vector<16x128xf32>
    %c0_14 = arith.constant 0 : index
    %c0_15 = arith.constant 0 : index
    %21 = vector.load %arg7[%c0_14, %c0_15] : memref<16x128xf32, #tpu.memory_space<vmem>>, vector<16x128xf32>
    tpu.vector_store %arg7[%c0_14, %c0_15], %20 {strides = array<i32>} : memref<16x128xf32, #tpu.memory_space<vmem>>, vector<16x128xf32>,
    return
  }
  func.func @transform_0(%arg0: i32, %arg1: i32) -> (i32, i32) {
    %c0_i32 = arith.constant 0 : i32
    %c0_i32_0 = arith.constant 0 : i32
    return %arg0, %c0_i32 : i32, i32
  }
  func.func @transform_1(%arg0: i32, %arg1: i32) -> (i32, i32) {
    %c0_i32 = arith.constant 0 : i32
    %c0_i32_0 = arith.constant 0 : i32
    return %c0_i32, %arg1 : i32, i32
  }
  func.func @transform_2(%arg0: i32, %arg1: i32) -> (i32, i32) {
    %c0_i32 = arith.constant 0 : i32
    %c0_i32_0 = arith.constant 0 : i32
    return %c0_i32, %arg1 : i32, i32
  }
  func.func @transform_3(%arg0: i32, %arg1: i32) -> (i32, i32) {
    %c0_i32 = arith.constant 0 : i32
    %c0_i32_0 = arith.constant 0 : i32
    return %arg1, %c0_i32 : i32, i32
  }
  func.func @transform_4(%arg0: i32, %arg1: i32) -> (i32, i32) {
    %c0_i32 = arith.constant 0 : i32
    %c0_i32_0 = arith.constant 0 : i32
    %c0_i32_1 = arith.constant 0 : i32
    return %c0_i32, %c0_i32_0 : i32, i32
  }
  func.func @transform_5(%arg0: i32, %arg1: i32) -> (i32, i32) {
    %c0_i32 = arith.constant 0 : i32
    %c0_i32_0 = arith.constant 0 : i32
    return %arg0, %c0_i32 : i32, i32
  }
}

</mosaic_0001>

<llo_original>
// kernel: _mlp_forward_impl.1
$region0: #{_mlp_forward_impl.1}
  #allocation0 [shape = 'u32[]', space=smem, size = 0x4, offset = 0x4, fixed_abs, tag = 'smem constant byte address 0x4 - core index']
  #allocation1 [shape = 'u32[144,128]{1,0:T(1,128)}', space=vmem, size = 0x12000, scoped, tag = 'internal scratch']
  %s0 = inlined_call_operand.vmem [shape: f32[16,128], index: 0, kind: input, shape index: {}]
  %s1 = inlined_call_operand.hbm [shape: f32[128,128], index: 1, kind: input, shape index: {}]
  %s2 = inlined_call_operand.vmem [shape: f32[1,128], index: 2, kind: input, shape index: {}]
  %s3 = inlined_call_operand.hbm [shape: f32[128,128], index: 3, kind: input, shape index: {}]
  %s4 = inlined_call_operand.vmem [shape: f32[1,128], index: 4, kind: input, shape index: {}]
  %s5 = inlined_call_operand.vmem [shape: f32[16,128], index: 5, kind: output, shape index: {}]
  %s6 = sld [smem:[#allocation0]]
  $region42: #{_mlp_forward_impl.1} parent=0
    _
  %s8 = ssub.s32 1, %s6
  %s9 = scalar_select 0, %s8, %s6
  $region1: #{_mlp_forward_impl.1} parent=0
    #allocation2 [shape = 'u8[65536]{0}', space=vmem, size = 0x10000, scoped, tag = 'input window, operand 1, single buffered']
    #allocation3 [shape = 's32[1]{0}', space=sflag, size = 0x4, scoped, tag = 'scoped memory for _mlp_forward_impl.1']
    #allocation4 [shape = 'u8[65536]{0}', space=vmem, size = 0x10000, scoped, tag = 'input window, operand 3, single buffered']
    #allocation5 [shape = 's32[1]{0}', space=sflag, size = 0x4, scoped, tag = 'scoped memory for _mlp_forward_impl.1']
    %10 = vsyncpa [#allocation3], 0
    %11 = vsyncpa [#allocation5], 0
    // Predicated region
    $region2: #{_mlp_forward_impl.1} parent=1 // pred_check
      _
    $region3: #{_mlp_forward_impl.1} parent=1 // pred_check_branch
      %13 = sbr.rel (0) target = $region5
    $region4: #{_mlp_forward_impl.1} parent=1 // pred_region
      _
    $region5: #{_mlp_forward_impl.1} parent=1 // pred_fallthru
      _
    // Predicated region
    $region6: #{_mlp_forward_impl.1} parent=1 // pred_check
      _
    $region7: #{_mlp_forward_impl.1} parent=1 // pred_check_branch
      %15 = sbr.rel (0) target = $region9
    $region8: #{_mlp_forward_impl.1} parent=1 // pred_region
      %s17 = ssub.s32 2048, 2048
      %18 = vsyncadd [#allocation3], %s17
      %s19 = sshll.u32 [#allocation2], 4
      %s20 = int_to_ptr.vmem [resolvable:$true] %s19
      %25 = dma.hbm_to_vmem [thread:$0]  %s1, 2048, %s20, [#allocation3], 128, 128, 8
    $region9: #{_mlp_forward_impl.1} parent=1 // pred_fallthru
      _
    // Predicated region
    $region10: #{_mlp_forward_impl.1} parent=1 // pred_check
      _
    $region11: #{_mlp_forward_impl.1} parent=1 // pred_check_branch
      %27 = sbr.rel (0) target = $region13
    $region12: #{_mlp_forward_impl.1} parent=1 // pred_region
      _
    $region13: #{_mlp_forward_impl.1} parent=1 // pred_fallthru
      _
    // Predicated region
    $region14: #{_mlp_forward_impl.1} parent=1 // pred_check
      _
    $region15: #{_mlp_forward_impl.1} parent=1 // pred_check_branch
      %29 = sbr.rel (0) target = $region17
    $region16: #{_mlp_forward_impl.1} parent=1 // pred_region
      %s31 = ssub.s32 2048, 2048
      %32 = vsyncadd [#allocation5], %s31
      %s33 = sshll.u32 [#allocation4], 4
      %s34 = int_to_ptr.vmem [resolvable:$true] %s33
      %39 = dma.hbm_to_vmem [thread:$0]  %s3, 2048, %s34, [#allocation5], 128, 128, 8
    $region17: #{_mlp_forward_impl.1} parent=1 // pred_fallthru
      _
    // Predicated region
    $region18: #{_mlp_forward_impl.1} parent=1 // pred_check
      _
    $region19: #{_mlp_forward_impl.1} parent=1 // pred_check_branch
      %41 = sbr.rel (0) target = $region21
    $region20: #{_mlp_forward_impl.1} parent=1 // pred_region
      _
    $region21: #{_mlp_forward_impl.1} parent=1 // pred_fallthru
      _
    // Predicated region
    $region22: #{_mlp_forward_impl.1} parent=1 // pred_check
      _
    $region23: #{_mlp_forward_impl.1} parent=1 // pred_check_branch
      %43 = sbr.rel (0) target = $region25
    $region24: #{_mlp_forward_impl.1} parent=1 // pred_region
      %44 = dma.done [#allocation3], 2048
    $region25: #{_mlp_forward_impl.1} parent=1 // pred_fallthru
      _
    // Predicated region
    $region26: #{_mlp_forward_impl.1} parent=1 // pred_check
      _
    $region27: #{_mlp_forward_impl.1} parent=1 // pred_check_branch
      %46 = sbr.rel (0) target = $region29
    $region28: #{_mlp_forward_impl.1} parent=1 // pred_region
      %47 = dma.done [#allocation5], 2048
    $region29: #{_mlp_forward_impl.1} parent=1 // pred_fallthru
      _
    %p48 = scmp.eq.s32.totalorder 0, 0
    // Predicated region
    $region30: #{_mlp_forward_impl.1} parent=1 // pred_check
      %p49 = pneg %p48
    $region31: #{_mlp_forward_impl.1} parent=1 // pred_check_branch
      %51 = sbr.rel (%p49) target = $region33
    $region32: #{_mlp_forward_impl.1} parent=1 // pred_region
      %v52 = vld [vmem:[%s4] sm:$0x1]
      %v54 = vlaneseq
      %v55 = vshrl.u32 %v54, 7
      %v56 = vsub.s32 0, %v55
      %v57 = vrot.slane %v52, %v56
      %59 = vst [vmem:[%s5] sm:$0xff] %v57
      %60 = vst [vmem:[%s5 + $0x8] sm:$0xff] %v57
    $region33: #{_mlp_forward_impl.1} parent=1 // pred_fallthru
      _
    %v61 = vld [vmem:[%s0] sm:$0xff]
    %v62 = vld [vmem:[%s0 + $0x8] sm:$0xff]
    %v63 = vld [vmem:[#allocation2] sm:$0xff]
    %v64 = vld [vmem:[#allocation2 + $0x8] sm:$0xff]
    %v65 = vld [vmem:[#allocation2 + $0x10] sm:$0xff]
    %v66 = vld [vmem:[#allocation2 + $0x18] sm:$0xff]
    %v67 = vld [vmem:[#allocation2 + $0x20] sm:$0xff]
    %v68 = vld [vmem:[#allocation2 + $0x28] sm:$0xff]
    %v69 = vld [vmem:[#allocation2 + $0x30] sm:$0xff]
    %v70 = vld [vmem:[#allocation2 + $0x38] sm:$0xff]
    %v71 = vld [vmem:[#allocation2 + $0x40] sm:$0xff]
    %v72 = vld [vmem:[#allocation2 + $0x48] sm:$0xff]
    %v73 = vld [vmem:[#allocation2 + $0x50] sm:$0xff]
    %v74 = vld [vmem:[#allocation2 + $0x58] sm:$0xff]
    %v75 = vld [vmem:[#allocation2 + $0x60] sm:$0xff]
    %v76 = vld [vmem:[#allocation2 + $0x68] sm:$0xff]
    %v77 = vld [vmem:[#allocation2 + $0x70] sm:$0xff]
    %v78 = vld [vmem:[#allocation2 + $0x78] sm:$0xff]
    %v79 = vld [vmem:[%s2] sm:$0x1]
    %v81 = vlaneseq
    %v82 = vshrl.u32 %v81, 7
    %v83 = vsub.s32 0, %v82
    %v84 = vrot.slane %v79, %v83
    %86 = vmatprep.subr.mxu0 0.0
    %87 = vmatpush1.msra.mxu0 %v63
    %88 = vmatprep.subr.mxu0 0.0
    %89 = vmatpush1.msra.mxu0 %v64
    %90 = vmatprep.subr.mxu0 0.0
    %91 = vmatpush1.msra.mxu0 %v65
    %92 = vmatprep.subr.mxu0 0.0
    %93 = vmatpush1.msra.mxu0 %v66
    %94 = vmatprep.subr.mxu0 0.0
    %95 = vmatpush1.msra.mxu0 %v67
    %96 = vmatprep.subr.mxu0 0.0
    %97 = vmatpush1.msra.mxu0 %v68
    %98 = vmatprep.subr.mxu0 0.0
    %99 = vmatpush1.msra.mxu0 %v69
    %100 = vmatprep.subr.mxu0 0.0
    %101 = vmatpush1.msra.mxu0 %v70
    %102 = vmatprep.subr.mxu0 0.0
    %103 = vmatpush1.msra.mxu0 %v71
    %104 = vmatprep.subr.mxu0 0.0
    %105 = vmatpush1.msra.mxu0 %v72
    %106 = vmatprep.subr.mxu0 0.0
    %107 = vmatpush1.msra.mxu0 %v73
    %108 = vmatprep.subr.mxu0 0.0
    %109 = vmatpush1.msra.mxu0 %v74
    %110 = vmatprep.subr.mxu0 0.0
    %111 = vmatpush1.msra.mxu0 %v75
    %112 = vmatprep.subr.mxu0 0.0
    %113 = vmatpush1.msra.mxu0 %v76
    %114 = vmatprep.subr.mxu0 0.0
    %115 = vmatpush1.msra.mxu0 %v77
    %116 = vmatprep.subr.mxu0 0.0
    %117 = vmatpush1.msra.mxu0 %v78
    %118 = vmatprep.subr.mxu0 0.0
    %119 = vmatpush1.msra.mxu0 0.0
    %120 = vmatprep.subr.mxu0 0.0
    %121 = vmatpush1.msra.mxu0 0.0
    %122 = vmatprep.subr.mxu0 0.0
    %123 = vmatpush1.msra.mxu0 0.0
    %124 = vmatprep.subr.mxu0 0.0
    %125 = vmatpush1.msra.mxu0 0.0
    %126 = vmatprep.subr.mxu0 0.0
    %127 = vmatpush1.msra.mxu0 0.0
    %128 = vmatprep.subr.mxu0 0.0
    %129 = vmatpush1.msra.mxu0 0.0
    %130 = vmatprep.subr.mxu0 0.0
    %131 = vmatpush1.msra.mxu0 0.0
    %132 = vmatprep.subr.mxu0 0.0
    %133 = vmatpush1.msra.mxu0 0.0
    %134 = vmatprep.subr.mxu0 0.0
    %135 = vmatpush1.msra.mxu0 0.0
    %136 = vmatprep.subr.mxu0 0.0
    %137 = vmatpush1.msra.mxu0 0.0
    %138 = vmatprep.subr.mxu0 0.0
    %139 = vmatpush1.msra.mxu0 0.0
    %140 = vmatprep.subr.mxu0 0.0
    %141 = vmatpush1.msra.mxu0 0.0
    %142 = vmatprep.subr.mxu0 0.0
    %143 = vmatpush1.msra.mxu0 0.0
    %144 = vmatprep.subr.mxu0 0.0
    %145 = vmatpush1.msra.mxu0 0.0
    %146 = vmatprep.subr.mxu0 0.0
    %147 = vmatpush1.msra.mxu0 0.0
    %148 = vmatprep.subr.mxu0 0.0
    %149 = vmatpush1.msra.mxu0 0.0
    %150 = vmatprep.mubr.f32.mxu0 0.0
    %151 = vmatmul.mubr.f32.gmra.mrb[0].mxu0 %v61
    %v152 = vpop.f32.mrb[0].mxu0
    %v153 = vadd.f32 %v84, %v152
    %v154 = vpop.f32.mrb[0].mxu0
    %155 = vmatprep.mubr.f32.mxu0 0.0
    %156 = vmatmul.mubr.f32.gmra.mrb[0].mxu0 %v62
    %v157 = vpop.f32.mrb[0].mxu0
    %v158 = vadd.f32 %v84, %v157
    %v159 = vpop.f32.mrb[0].mxu0
    %160 = vdwg.mxu0
    %v161 = vmul.f32 %v153, 0.5
    %v162 = vmul.f32 %v158, 0.5
    %v163 = vmul.f32 %v153, 0.70710677
    %v164 = vmul.f32 %v158, 0.70710677
    %v165 = verf.f32.pop %v163
    %v166 = verf.f32.pop %v164
    %v167 = vadd.f32 %v165, 1.0
    %v168 = vadd.f32 %v166, 1.0
    %v169 = vmul.f32 %v161, %v167
    %v170 = vmul.f32 %v162, %v168
    %v171 = vld [vmem:[%s5] sm:$0xff]
    %v172 = vld [vmem:[%s5 + $0x8] sm:$0xff]
    %v173 = vld [vmem:[#allocation4] sm:$0xff]
    %v174 = vld [vmem:[#allocation4 + $0x8] sm:$0xff]
    %v175 = vld [vmem:[#allocation4 + $0x10] sm:$0xff]
    %v176 = vld [vmem:[#allocation4 + $0x18] sm:$0xff]
    %v177 = vld [vmem:[#allocation4 + $0x20] sm:$0xff]
    %v178 = vld [vmem:[#allocation4 + $0x28] sm:$0xff]
    %v179 = vld [vmem:[#allocation4 + $0x30] sm:$0xff]
    %v180 = vld [vmem:[#allocation4 + $0x38] sm:$0xff]
    %v181 = vld [vmem:[#allocation4 + $0x40] sm:$0xff]
    %v182 = vld [vmem:[#allocation4 + $0x48] sm:$0xff]
    %v183 = vld [vmem:[#allocation4 + $0x50] sm:$0xff]
    %v184 = vld [vmem:[#allocation4 + $0x58] sm:$0xff]
    %v185 = vld [vmem:[#allocation4 + $0x60] sm:$0xff]
    %v186 = vld [vmem:[#allocation4 + $0x68] sm:$0xff]
    %v187 = vld [vmem:[#allocation4 + $0x70] sm:$0xff]
    %v188 = vld [vmem:[#allocation4 + $0x78] sm:$0xff]
    %189 = vmatprep.subr.mxu0 0.0
    %190 = vmatpush1.msra.mxu0 %v173
    %191 = vmatprep.subr.mxu0 0.0
    %192 = vmatpush1.msra.mxu0 %v174
    %193 = vmatprep.subr.mxu0 0.0
    %194 = vmatpush1.msra.mxu0 %v175
    %195 = vmatprep.subr.mxu0 0.0
    %196 = vmatpush1.msra.mxu0 %v176
    %197 = vmatprep.subr.mxu0 0.0
    %198 = vmatpush1.msra.mxu0 %v177
    %199 = vmatprep.subr.mxu0 0.0
    %200 = vmatpush1.msra.mxu0 %v178
    %201 = vmatprep.subr.mxu0 0.0
    %202 = vmatpush1.msra.mxu0 %v179
    %203 = vmatprep.subr.mxu0 0.0
    %204 = vmatpush1.msra.mxu0 %v180
    %205 = vmatprep.subr.mxu0 0.0
    %206 = vmatpush1.msra.mxu0 %v181
    %207 = vmatprep.subr.mxu0 0.0
    %208 = vmatpush1.msra.mxu0 %v182
    %209 = vmatprep.subr.mxu0 0.0
    %210 = vmatpush1.msra.mxu0 %v183
    %211 = vmatprep.subr.mxu0 0.0
    %212 = vmatpush1.msra.mxu0 %v184
    %213 = vmatprep.subr.mxu0 0.0
    %214 = vmatpush1.msra.mxu0 %v185
    %215 = vmatprep.subr.mxu0 0.0
    %216 = vmatpush1.msra.mxu0 %v186
    %217 = vmatprep.subr.mxu0 0.0
    %218 = vmatpush1.msra.mxu0 %v187
    %219 = vmatprep.subr.mxu0 0.0
    %220 = vmatpush1.msra.mxu0 %v188
    %221 = vmatprep.subr.mxu0 0.0
    %222 = vmatpush1.msra.mxu0 0.0
    %223 = vmatprep.subr.mxu0 0.0
    %224 = vmatpush1.msra.mxu0 0.0
    %225 = vmatprep.subr.mxu0 0.0
    %226 = vmatpush1.msra.mxu0 0.0
    %227 = vmatprep.subr.mxu0 0.0
    %228 = vmatpush1.msra.mxu0 0.0
    %229 = vmatprep.subr.mxu0 0.0
    %230 = vmatpush1.msra.mxu0 0.0
    %231 = vmatprep.subr.mxu0 0.0
    %232 = vmatpush1.msra.mxu0 0.0
    %233 = vmatprep.subr.mxu0 0.0
    %234 = vmatpush1.msra.mxu0 0.0
    %235 = vmatprep.subr.mxu0 0.0
    %236 = vmatpush1.msra.mxu0 0.0
    %237 = vmatprep.subr.mxu0 0.0
    %238 = vmatpush1.msra.mxu0 0.0
    %239 = vmatprep.subr.mxu0 0.0
    %240 = vmatpush1.msra.mxu0 0.0
    %241 = vmatprep.subr.mxu0 0.0
    %242 = vmatpush1.msra.mxu0 0.0
    %243 = vmatprep.subr.mxu0 0.0
    %244 = vmatpush1.msra.mxu0 0.0
    %245 = vmatprep.subr.mxu0 0.0
    %246 = vmatpush1.msra.mxu0 0.0
    %247 = vmatprep.subr.mxu0 0.0
    %248 = vmatpush1.msra.mxu0 0.0
    %249 = vmatprep.subr.mxu0 0.0
    %250 = vmatpush1.msra.mxu0 0.0
    %251 = vmatprep.subr.mxu0 0.0
    %252 = vmatpush1.msra.mxu0 0.0
    %253 = vmatprep.mubr.f32.mxu0 0.0
    %254 = vmatmul.mubr.f32.gmra.mrb[0].mxu0 %v169
    %v255 = vpop.f32.mrb[0].mxu0
    %v256 = vadd.f32 0.0, %v255
    %v257 = vpop.f32.mrb[0].mxu0
    %258 = vmatprep.mubr.f32.mxu0 0.0
    %259 = vmatmul.mubr.f32.gmra.mrb[0].mxu0 %v170
    %v260 = vpop.f32.mrb[0].mxu0
    %v261 = vadd.f32 0.0, %v260
    %v262 = vpop.f32.mrb[0].mxu0
    %263 = vdwg.mxu0
    %v264 = vadd.f32 %v171, %v256
    %v265 = vadd.f32 %v172, %v261
    %266 = vst [vmem:[%s5] sm:$0xff] %v264
    %267 = vst [vmem:[%s5 + $0x8] sm:$0xff] %v265
    // Predicated region
    $region34: #{_mlp_forward_impl.1} parent=1 // pred_check
      _
    $region35: #{_mlp_forward_impl.1} parent=1 // pred_check_branch
      %269 = sbr.rel (0) target = $region37
    $region36: #{_mlp_forward_impl.1} parent=1 // pred_region
      _
    $region37: #{_mlp_forward_impl.1} parent=1 // pred_fallthru
      _
    // Predicated region
    $region38: #{_mlp_forward_impl.1} parent=1 // pred_check
      _
    $region39: #{_mlp_forward_impl.1} parent=1 // pred_check_branch
      %271 = sbr.rel (0) target = $region41
    $region40: #{_mlp_forward_impl.1} parent=1 // pred_region
      _
    $region41: #{_mlp_forward_impl.1} parent=1 // pred_fallthru
      _
    %272 = vsyncpa [#allocation3], 1
    %273 = vsyncpa [#allocation5], 1

</llo_original>
